<compile_context>
chip_gen: v7x
topology: tpu7x:2x2x1
jax: 0.10.0
libtpu: 0.0.40
codegen_flags: <defaults>
</compile_context>

<pallas_src>
import jax
import jax.numpy as jnp
from jax.experimental import pallas as pl
from jax.experimental.pallas import tpu as pltpu

K_PAD = 128    # padded contraction dim (C*K = 36 -> 128)
OUT_PAD = 128  # padded output feature dim (lane-dense stores, no vst.msk)


def cnn_kernel(x_ref, w_ref, b_ref, w2_ref, b2_ref, out_ref):
    # x_ref: (TN, K_PAD)      w_ref: (K_PAD, MID)   b_ref: (1, MID)
    # w2_ref: (MID, OUT_PAD)  b2_ref: (1, OUT_PAD)  out_ref: (TN, OUT_PAD)
    h1 = jnp.dot(x_ref[...], w_ref[...], preferred_element_type=jnp.float32)
    h1 = jnp.maximum(h1 + b_ref[...], 0.0)
    out_ref[...] = (
        jnp.dot(h1, w2_ref[...], preferred_element_type=jnp.float32) + b2_ref[...]
    )


def _round_up(x, m):
    return ((x + m - 1) // m) * m


def cnn_forward(x, torch_params, *, tile_n=512):
    """Forward pass of the CNN module.

    x: (N, C, L) float32, with L == conv kernel size (conv output length 1,
       as required by the fixed Linear(256, 128)).
    torch_params: PyTorch-layout weights
       (wc (256, C, L), bc (256,), w1 (128, 256), b1 (128,),
        w2 (OUT, 128), b2 (OUT,)).
    """
    wc, bc, w1, b1, w2, b2 = torch_params
    N, C, L = x.shape
    H, Cw, K = wc.shape
    # Explicit guard: the conv-as-matmul rewrite is only valid when the conv
    # window covers the whole sequence (output length 1).
    assert (C, L) == (Cw, K), "Conv1d window must cover the whole sequence (L == kernel_size)"
    MID = w1.shape[0]
    OUT = w2.shape[0]
    assert MID == OUT_PAD, "fc hidden width expected to be 128 (lane-aligned)"
    assert OUT <= OUT_PAD, "output_dim larger than padded lane width"
    CK = C * K
    assert CK <= K_PAD, "flattened conv window larger than padded contraction dim"

    # --- Host-side (trace-time) weight prep: fuse conv + fc1, pad tiles. ---
    wc_mat = wc.reshape(H, CK).T                       # (C*K, 256)
    w_fused = wc_mat @ w1.T                            # (C*K, 128)
    b_fused = bc @ w1.T + b1                           # (128,)

    w_fused_p = jnp.zeros((K_PAD, MID), jnp.float32).at[:CK, :].set(w_fused)
    b_fused_p = b_fused.reshape(1, MID).astype(jnp.float32)
    w2_p = jnp.zeros((MID, OUT_PAD), jnp.float32).at[:, :OUT].set(w2.T)
    b2_p = jnp.zeros((1, OUT_PAD), jnp.float32).at[:, :OUT].set(b2)

    # --- Batch tiling: pad N to a multiple of the (sublane-aligned) tile. ---
    tn = min(_round_up(tile_n, 8), _round_up(N, 8))
    n_pad = _round_up(N, tn)
    x_flat = x.reshape(N, CK).astype(jnp.float32)
    x_p = jnp.zeros((n_pad, K_PAD), jnp.float32).at[:N, :CK].set(x_flat)

    grid = (n_pad // tn,)
    out_p = pl.pallas_call(
        cnn_kernel,
        out_shape=jax.ShapeDtypeStruct((n_pad, OUT_PAD), jnp.float32),
        grid_spec=pltpu.PrefetchScalarGridSpec(
            num_scalar_prefetch=0,
            grid=grid,
            in_specs=[
                pl.BlockSpec((tn, K_PAD), lambda i: (i, 0)),      # x tile (pipelined)
                pl.BlockSpec((K_PAD, MID), lambda i: (0, 0)),     # fused weight (resident)
                pl.BlockSpec((1, MID), lambda i: (0, 0)),         # fused bias (resident)
                pl.BlockSpec((MID, OUT_PAD), lambda i: (0, 0)),   # fc2 weight (resident)
                pl.BlockSpec((1, OUT_PAD), lambda i: (0, 0)),     # fc2 bias (resident)
            ],
            out_specs=pl.BlockSpec((tn, OUT_PAD), lambda i: (i, 0)),
        ),
        compiler_params=pltpu.CompilerParams(
            dimension_semantics=("parallel",),
        ),
    )(x_p, w_fused_p, b_fused_p, w2_p, b2_p)

    return out_p[:N, :OUT]


if __name__ == "__main__":
    # Shapes consistent with the module: batch=2, input_channels=4,
    # L = kernel_size = 9, hidden_size = 256 (fixed by fc), output_dim = 16.
    N, C, L, H, MID, OUT = 2, 4, 9, 256, 128, 16

    key = jax.random.PRNGKey(0)
    keys = jax.random.split(key, 7)

    x = jax.random.normal(keys[0], (N, C, L), dtype=jnp.float32)

    # Deterministic PyTorch-style init (uniform +/- 1/sqrt(fan_in)).
    bc_bound = 1.0 / jnp.sqrt(jnp.float32(C * L))
    wc = jax.random.uniform(keys[1], (H, C, L), jnp.float32, -bc_bound, bc_bound)
    bc = jax.random.uniform(keys[2], (H,), jnp.float32, -bc_bound, bc_bound)

    b1_bound = 1.0 / jnp.sqrt(jnp.float32(H))
    w1 = jax.random.uniform(keys[3], (MID, H), jnp.float32, -b1_bound, b1_bound)
    b1 = jax.random.uniform(keys[4], (MID,), jnp.float32, -b1_bound, b1_bound)

    b2_bound = 1.0 / jnp.sqrt(jnp.float32(MID))
    w2 = jax.random.uniform(keys[5], (OUT, MID), jnp.float32, -b2_bound, b2_bound)
    b2 = jax.random.uniform(keys[6], (OUT,), jnp.float32, -b2_bound, b2_bound)

    params = (wc, bc, w1, b1, w2, b2)

    out = jax.block_until_ready(jax.jit(cnn_forward)(x, params))
    assert out.shape == (N, OUT) and out.dtype == jnp.float32

    # Unfused pure-JAX reference of the exact PyTorch forward semantics.
    ref_h = x.reshape(N, C * L) @ wc.reshape(H, C * L).T + bc
    ref_h1 = jnp.maximum(ref_h @ w1.T + b1, 0.0)
    ref = ref_h1 @ w2.T + b2
    assert jnp.allclose(out, ref, atol=1e-4, rtol=1e-4), "Pallas output mismatch"

    print("KERNEL_OK")
</pallas_src>

<mosaic_0001>
module attributes {stable_mosaic.version = 11 : i64} {
  func.func @cnn_kernel(%arg0: i32, %arg1: memref<8x128xf32, #tpu.memory_space<vmem>>, %arg2: memref<128x128xf32, #tpu.memory_space<vmem>>, %arg3: memref<1x128xf32, #tpu.memory_space<vmem>>, %arg4: memref<128x128xf32, #tpu.memory_space<vmem>>, %arg5: memref<1x128xf32, #tpu.memory_space<vmem>>, %arg6: memref<8x128xf32, #tpu.memory_space<vmem>>) attributes {dimension_semantics = [#tpu.dimension_semantics<parallel>], iteration_bounds = array<i64: 1>, scalar_prefetch = 0 : i64, scratch_operands = 0 : i64, tpu.core_type = #tpu.core_type<tc>, window_params = [{transform_indices = @transform_0, window_bounds = array<i64: 8, 128>}, {pipeline_mode = #tpu.pipeline_mode<synchronous>, transform_indices = @transform_1, window_bounds = array<i64: 128, 128>}, {pipeline_mode = #tpu.pipeline_mode<synchronous>, transform_indices = @transform_2, window_bounds = array<i64: 1, 128>}, {pipeline_mode = #tpu.pipeline_mode<synchronous>, transform_indices = @transform_3, window_bounds = array<i64: 128, 128>}, {pipeline_mode = #tpu.pipeline_mode<synchronous>, transform_indices = @transform_4, window_bounds = array<i64: 1, 128>}, {transform_indices = @transform_5, window_bounds = array<i64: 8, 128>}]} {
    %c0 = arith.constant 0 : index
    %c0_0 = arith.constant 0 : index
    %0 = vector.load %arg1[%c0, %c0_0] : memref<8x128xf32, #tpu.memory_space<vmem>>, vector<8x128xf32>
    %c0_1 = arith.constant 0 : index
    %c0_2 = arith.constant 0 : index
    %1 = vector.load %arg2[%c0_1, %c0_2] : memref<128x128xf32, #tpu.memory_space<vmem>>, vector<128x128xf32>
    %cst = arith.constant dense<0.000000e+00> : vector<8x128xf32>
    %2 = tpu.matmul %0, %1, %cst {dimension_numbers = #tpu.dot_dimension_numbers<[1], [0], [0], [1], [0, 0, 1, 1], [], []>} : vector<8x128xf32>, vector<128x128xf32>, vector<8x128xf32> -> vector<8x128xf32>
    %c0_3 = arith.constant 0 : index
    %c0_4 = arith.constant 0 : index
    %3 = vector.load %arg3[%c0_3, %c0_4] : memref<1x128xf32, #tpu.memory_space<vmem>>, vector<1x128xf32>
    %4 = vector.broadcast %3 : vector<1x128xf32> to vector<8x128xf32>
    %5 = arith.addf %2, %4 : vector<8x128xf32>
    %cst_5 = arith.constant 0.000000e+00 : f32
    %6 = vector.broadcast %cst_5 : f32 to vector<8x128xf32>
    %7 = arith.maximumf %5, %6 : vector<8x128xf32>
    %c0_6 = arith.constant 0 : index
    %c0_7 = arith.constant 0 : index
    %8 = vector.load %arg4[%c0_6, %c0_7] : memref<128x128xf32, #tpu.memory_space<vmem>>, vector<128x128xf32>
    %cst_8 = arith.constant dense<0.000000e+00> : vector<8x128xf32>
    %9 = tpu.matmul %7, %8, %cst_8 {dimension_numbers = #tpu.dot_dimension_numbers<[1], [0], [0], [1], [0, 0, 1, 1], [], []>} : vector<8x128xf32>, vector<128x128xf32>, vector<8x128xf32> -> vector<8x128xf32>
    %c0_9 = arith.constant 0 : index
    %c0_10 = arith.constant 0 : index
    %10 = vector.load %arg5[%c0_9, %c0_10] : memref<1x128xf32, #tpu.memory_space<vmem>>, vector<1x128xf32>
    %11 = vector.broadcast %10 : vector<1x128xf32> to vector<8x128xf32>
    %12 = arith.addf %9, %11 : vector<8x128xf32>
    %c0_11 = arith.constant 0 : index
    %c0_12 = arith.constant 0 : index
    %13 = vector.load %arg6[%c0_11, %c0_12] : memref<8x128xf32, #tpu.memory_space<vmem>>, vector<8x128xf32>
    tpu.vector_store %arg6[%c0_11, %c0_12], %12 {strides = array<i32>} : memref<8x128xf32, #tpu.memory_space<vmem>>, vector<8x128xf32>,
    return
  }
  func.func @transform_0(%arg0: i32) -> (i32, i32) {
    %c0_i32 = arith.constant 0 : i32
    %c0_i32_0 = arith.constant 0 : i32
    return %arg0, %c0_i32 : i32, i32
  }
  func.func @transform_1(%arg0: i32) -> (i32, i32) {
    %c0_i32 = arith.constant 0 : i32
    %c0_i32_0 = arith.constant 0 : i32
    %c0_i32_1 = arith.constant 0 : i32
    return %c0_i32, %c0_i32_0 : i32, i32
  }
  func.func @transform_2(%arg0: i32) -> (i32, i32) {
    %c0_i32 = arith.constant 0 : i32
    %c0_i32_0 = arith.constant 0 : i32
    %c0_i32_1 = arith.constant 0 : i32
    return %c0_i32, %c0_i32_0 : i32, i32
  }
  func.func @transform_3(%arg0: i32) -> (i32, i32) {
    %c0_i32 = arith.constant 0 : i32
    %c0_i32_0 = arith.constant 0 : i32
    %c0_i32_1 = arith.constant 0 : i32
    return %c0_i32, %c0_i32_0 : i32, i32
  }
  func.func @transform_4(%arg0: i32) -> (i32, i32) {
    %c0_i32 = arith.constant 0 : i32
    %c0_i32_0 = arith.constant 0 : i32
    %c0_i32_1 = arith.constant 0 : i32
    return %c0_i32, %c0_i32_0 : i32, i32
  }
  func.func @transform_5(%arg0: i32) -> (i32, i32) {
    %c0_i32 = arith.constant 0 : i32
    %c0_i32_0 = arith.constant 0 : i32
    return %arg0, %c0_i32 : i32, i32
  }
}

</mosaic_0001>

<llo_original>
// kernel: cnn_forward.1
$region0: #{cnn_forward.1}
  #allocation0 [shape = 'u32[]', space=smem, size = 0x4, offset = 0x4, fixed_abs, tag = 'smem constant byte address 0x4 - core index']
  #allocation1 [shape = 'u32[144,128]{1,0:T(1,128)}', space=vmem, size = 0x12000, scoped, tag = 'internal scratch']
  %s0 = inlined_call_operand.vmem [shape: f32[8,128], index: 0, kind: input, shape index: {}]
  %s1 = inlined_call_operand.vmem [shape: f32[128,128], index: 1, kind: input, shape index: {}]
  %s2 = inlined_call_operand.vmem [shape: f32[1,128], index: 2, kind: input, shape index: {}]
  %s3 = inlined_call_operand.vmem [shape: f32[128,128], index: 3, kind: input, shape index: {}]
  %s4 = inlined_call_operand.vmem [shape: f32[1,128], index: 4, kind: input, shape index: {}]
  %s5 = inlined_call_operand.vmem [shape: f32[8,128], index: 5, kind: output, shape index: {}]
  %s6 = sld [smem:[#allocation0]]
  $region30: #{cnn_forward.1} parent=0
    _
  %s8 = ssub.s32 1, %s6
  %s9 = scalar_select 0, %s8, %s6
  // Predicated region
  $region2: #{cnn_forward.1} parent=0 // pred_check
    _
  $region3: #{cnn_forward.1} parent=0 // pred_check_branch
    %11 = sbr.rel (0) target = $region5
  $region4: #{cnn_forward.1} parent=0 // pred_region
    _
  $region5: #{cnn_forward.1} parent=0 // pred_fallthru
    _
  // Predicated region
  $region6: #{cnn_forward.1} parent=0 // pred_check
    _
  $region7: #{cnn_forward.1} parent=0 // pred_check_branch
    %13 = sbr.rel (0) target = $region9
  $region8: #{cnn_forward.1} parent=0 // pred_region
    _
  $region9: #{cnn_forward.1} parent=0 // pred_fallthru
    _
  // Predicated region
  $region10: #{cnn_forward.1} parent=0 // pred_check
    _
  $region11: #{cnn_forward.1} parent=0 // pred_check_branch
    %15 = sbr.rel (0) target = $region13
  $region12: #{cnn_forward.1} parent=0 // pred_region
    _
  $region13: #{cnn_forward.1} parent=0 // pred_fallthru
    _
  // Predicated region
  $region14: #{cnn_forward.1} parent=0 // pred_check
    _
  $region15: #{cnn_forward.1} parent=0 // pred_check_branch
    %17 = sbr.rel (0) target = $region17
  $region16: #{cnn_forward.1} parent=0 // pred_region
    _
  $region17: #{cnn_forward.1} parent=0 // pred_fallthru
    _
  // Predicated region
  $region18: #{cnn_forward.1} parent=0 // pred_check
    _
  $region19: #{cnn_forward.1} parent=0 // pred_check_branch
    %19 = sbr.rel (0) target = $region21
  $region20: #{cnn_forward.1} parent=0 // pred_region
    _
  $region21: #{cnn_forward.1} parent=0 // pred_fallthru
    _
  %v20 = vld [vmem:[%s0] sm:$0xff]
  %v21 = vld [vmem:[%s1] sm:$0xff]
  %v22 = vld [vmem:[%s1 + $0x8] sm:$0xff]
  %v23 = vld [vmem:[%s1 + $0x10] sm:$0xff]
  %v24 = vld [vmem:[%s1 + $0x18] sm:$0xff]
  %v25 = vld [vmem:[%s1 + $0x20] sm:$0xff]
  %v26 = vld [vmem:[%s1 + $0x28] sm:$0xff]
  %v27 = vld [vmem:[%s1 + $0x30] sm:$0xff]
  %v28 = vld [vmem:[%s1 + $0x38] sm:$0xff]
  %v29 = vld [vmem:[%s1 + $0x40] sm:$0xff]
  %v30 = vld [vmem:[%s1 + $0x48] sm:$0xff]
  %v31 = vld [vmem:[%s1 + $0x50] sm:$0xff]
  %v32 = vld [vmem:[%s1 + $0x58] sm:$0xff]
  %v33 = vld [vmem:[%s1 + $0x60] sm:$0xff]
  %v34 = vld [vmem:[%s1 + $0x68] sm:$0xff]
  %v35 = vld [vmem:[%s1 + $0x70] sm:$0xff]
  %v36 = vld [vmem:[%s1 + $0x78] sm:$0xff]
  %v37 = vld [vmem:[%s2] sm:$0x1]
  %v39 = vlaneseq
  %v40 = vshrl.u32 %v39, 7
  %v41 = vsub.s32 0, %v40
  %v42 = vrot.slane %v37, %v41
  %44 = vmatprep.subr.mxu0 0.0
  %45 = vmatpush1.msra.mxu0 %v21
  %46 = vmatprep.subr.mxu0 0.0
  %47 = vmatpush1.msra.mxu0 %v22
  %48 = vmatprep.subr.mxu0 0.0
  %49 = vmatpush1.msra.mxu0 %v23
  %50 = vmatprep.subr.mxu0 0.0
  %51 = vmatpush1.msra.mxu0 %v24
  %52 = vmatprep.subr.mxu0 0.0
  %53 = vmatpush1.msra.mxu0 %v25
  %54 = vmatprep.subr.mxu0 0.0
  %55 = vmatpush1.msra.mxu0 %v26
  %56 = vmatprep.subr.mxu0 0.0
  %57 = vmatpush1.msra.mxu0 %v27
  %58 = vmatprep.subr.mxu0 0.0
  %59 = vmatpush1.msra.mxu0 %v28
  %60 = vmatprep.subr.mxu0 0.0
  %61 = vmatpush1.msra.mxu0 %v29
  %62 = vmatprep.subr.mxu0 0.0
  %63 = vmatpush1.msra.mxu0 %v30
  %64 = vmatprep.subr.mxu0 0.0
  %65 = vmatpush1.msra.mxu0 %v31
  %66 = vmatprep.subr.mxu0 0.0
  %67 = vmatpush1.msra.mxu0 %v32
  %68 = vmatprep.subr.mxu0 0.0
  %69 = vmatpush1.msra.mxu0 %v33
  %70 = vmatprep.subr.mxu0 0.0
  %71 = vmatpush1.msra.mxu0 %v34
  %72 = vmatprep.subr.mxu0 0.0
  %73 = vmatpush1.msra.mxu0 %v35
  %74 = vmatprep.subr.mxu0 0.0
  %75 = vmatpush1.msra.mxu0 %v36
  %76 = vmatprep.subr.mxu0 0.0
  %77 = vmatpush1.msra.mxu0 0.0
  %78 = vmatprep.subr.mxu0 0.0
  %79 = vmatpush1.msra.mxu0 0.0
  %80 = vmatprep.subr.mxu0 0.0
  %81 = vmatpush1.msra.mxu0 0.0
  %82 = vmatprep.subr.mxu0 0.0
  %83 = vmatpush1.msra.mxu0 0.0
  %84 = vmatprep.subr.mxu0 0.0
  %85 = vmatpush1.msra.mxu0 0.0
  %86 = vmatprep.subr.mxu0 0.0
  %87 = vmatpush1.msra.mxu0 0.0
  %88 = vmatprep.subr.mxu0 0.0
  %89 = vmatpush1.msra.mxu0 0.0
  %90 = vmatprep.subr.mxu0 0.0
  %91 = vmatpush1.msra.mxu0 0.0
  %92 = vmatprep.subr.mxu0 0.0
  %93 = vmatpush1.msra.mxu0 0.0
  %94 = vmatprep.subr.mxu0 0.0
  %95 = vmatpush1.msra.mxu0 0.0
  %96 = vmatprep.subr.mxu0 0.0
  %97 = vmatpush1.msra.mxu0 0.0
  %98 = vmatprep.subr.mxu0 0.0
  %99 = vmatpush1.msra.mxu0 0.0
  %100 = vmatprep.subr.mxu0 0.0
  %101 = vmatpush1.msra.mxu0 0.0
  %102 = vmatprep.subr.mxu0 0.0
  %103 = vmatpush1.msra.mxu0 0.0
  %104 = vmatprep.subr.mxu0 0.0
  %105 = vmatpush1.msra.mxu0 0.0
  %106 = vmatprep.subr.mxu0 0.0
  %107 = vmatpush1.msra.mxu0 0.0
  %108 = vmatprep.mubr.f32.mxu0 0.0
  %109 = vmatmul.mubr.f32.gmra.mrb[0].mxu0 %v20
  %v110 = vpop.f32.mrb[0].mxu0
  %v111 = vadd.f32 %v42, %v110
  %v112 = vpop.f32.mrb[0].mxu0
  %113 = vdwg.mxu0
  %v114 = vmax.f32 %v111, 0.0
  %v115 = vld [vmem:[%s3] sm:$0xff]
  %v116 = vld [vmem:[%s3 + $0x8] sm:$0xff]
  %v117 = vld [vmem:[%s3 + $0x10] sm:$0xff]
  %v118 = vld [vmem:[%s3 + $0x18] sm:$0xff]
  %v119 = vld [vmem:[%s3 + $0x20] sm:$0xff]
  %v120 = vld [vmem:[%s3 + $0x28] sm:$0xff]
  %v121 = vld [vmem:[%s3 + $0x30] sm:$0xff]
  %v122 = vld [vmem:[%s3 + $0x38] sm:$0xff]
  %v123 = vld [vmem:[%s3 + $0x40] sm:$0xff]
  %v124 = vld [vmem:[%s3 + $0x48] sm:$0xff]
  %v125 = vld [vmem:[%s3 + $0x50] sm:$0xff]
  %v126 = vld [vmem:[%s3 + $0x58] sm:$0xff]
  %v127 = vld [vmem:[%s3 + $0x60] sm:$0xff]
  %v128 = vld [vmem:[%s3 + $0x68] sm:$0xff]
  %v129 = vld [vmem:[%s3 + $0x70] sm:$0xff]
  %v130 = vld [vmem:[%s3 + $0x78] sm:$0xff]
  %v131 = vld [vmem:[%s4] sm:$0x1]
  %v133 = vlaneseq
  %v134 = vshrl.u32 %v133, 7
  %v135 = vsub.s32 0, %v134
  %v136 = vrot.slane %v131, %v135
  %138 = vmatprep.subr.mxu0 0.0
  %139 = vmatpush1.msra.mxu0 %v115
  %140 = vmatprep.subr.mxu0 0.0
  %141 = vmatpush1.msra.mxu0 %v116
  %142 = vmatprep.subr.mxu0 0.0
  %143 = vmatpush1.msra.mxu0 %v117
  %144 = vmatprep.subr.mxu0 0.0
  %145 = vmatpush1.msra.mxu0 %v118
  %146 = vmatprep.subr.mxu0 0.0
  %147 = vmatpush1.msra.mxu0 %v119
  %148 = vmatprep.subr.mxu0 0.0
  %149 = vmatpush1.msra.mxu0 %v120
  %150 = vmatprep.subr.mxu0 0.0
  %151 = vmatpush1.msra.mxu0 %v121
  %152 = vmatprep.subr.mxu0 0.0
  %153 = vmatpush1.msra.mxu0 %v122
  %154 = vmatprep.subr.mxu0 0.0
  %155 = vmatpush1.msra.mxu0 %v123
  %156 = vmatprep.subr.mxu0 0.0
  %157 = vmatpush1.msra.mxu0 %v124
  %158 = vmatprep.subr.mxu0 0.0
  %159 = vmatpush1.msra.mxu0 %v125
  %160 = vmatprep.subr.mxu0 0.0
  %161 = vmatpush1.msra.mxu0 %v126
  %162 = vmatprep.subr.mxu0 0.0
  %163 = vmatpush1.msra.mxu0 %v127
  %164 = vmatprep.subr.mxu0 0.0
  %165 = vmatpush1.msra.mxu0 %v128
  %166 = vmatprep.subr.mxu0 0.0
  %167 = vmatpush1.msra.mxu0 %v129
  %168 = vmatprep.subr.mxu0 0.0
  %169 = vmatpush1.msra.mxu0 %v130
  %170 = vmatprep.subr.mxu0 0.0
  %171 = vmatpush1.msra.mxu0 0.0
  %172 = vmatprep.subr.mxu0 0.0
  %173 = vmatpush1.msra.mxu0 0.0
  %174 = vmatprep.subr.mxu0 0.0
  %175 = vmatpush1.msra.mxu0 0.0
  %176 = vmatprep.subr.mxu0 0.0
  %177 = vmatpush1.msra.mxu0 0.0
  %178 = vmatprep.subr.mxu0 0.0
  %179 = vmatpush1.msra.mxu0 0.0
  %180 = vmatprep.subr.mxu0 0.0
  %181 = vmatpush1.msra.mxu0 0.0
  %182 = vmatprep.subr.mxu0 0.0
  %183 = vmatpush1.msra.mxu0 0.0
  %184 = vmatprep.subr.mxu0 0.0
  %185 = vmatpush1.msra.mxu0 0.0
  %186 = vmatprep.subr.mxu0 0.0
  %187 = vmatpush1.msra.mxu0 0.0
  %188 = vmatprep.subr.mxu0 0.0
  %189 = vmatpush1.msra.mxu0 0.0
  %190 = vmatprep.subr.mxu0 0.0
  %191 = vmatpush1.msra.mxu0 0.0
  %192 = vmatprep.subr.mxu0 0.0
  %193 = vmatpush1.msra.mxu0 0.0
  %194 = vmatprep.subr.mxu0 0.0
  %195 = vmatpush1.msra.mxu0 0.0
  %196 = vmatprep.subr.mxu0 0.0
  %197 = vmatpush1.msra.mxu0 0.0
  %198 = vmatprep.subr.mxu0 0.0
  %199 = vmatpush1.msra.mxu0 0.0
  %200 = vmatprep.subr.mxu0 0.0
  %201 = vmatpush1.msra.mxu0 0.0
  %202 = vmatprep.mubr.f32.mxu0 0.0
  %203 = vmatmul.mubr.f32.gmra.mrb[0].mxu0 %v114
  %v204 = vpop.f32.mrb[0].mxu0
  %v205 = vadd.f32 %v136, %v204
  %v206 = vpop.f32.mrb[0].mxu0
  %207 = vdwg.mxu0
  %208 = vst [vmem:[%s5] sm:$0xff] %v205
  // Predicated region
  $region22: #{cnn_forward.1} parent=0 // pred_check
    _
  $region23: #{cnn_forward.1} parent=0 // pred_check_branch
    %210 = sbr.rel (0) target = $region25
  $region24: #{cnn_forward.1} parent=0 // pred_region
    _
  $region25: #{cnn_forward.1} parent=0 // pred_fallthru
    _
  // Predicated region
  $region26: #{cnn_forward.1} parent=0 // pred_check
    _
  $region27: #{cnn_forward.1} parent=0 // pred_check_branch
    %212 = sbr.rel (0) target = $region29
  $region28: #{cnn_forward.1} parent=0 // pred_region
    _
  $region29: #{cnn_forward.1} parent=0 // pred_fallthru
    _

</llo_original>
